<compile_context>
chip_gen: v6e
topology: v6e:2x2x1
jax: 0.10.0
libtpu: 0.0.40
codegen_flags: <defaults>
</compile_context>

<pallas_src>
import functools

import jax
import jax.numpy as jnp
from jax.experimental import pallas as pl
from jax.experimental.pallas import tpu as pltpu


def _round_up(n: int, m: int) -> int:
    return ((n + m - 1) // m) * m


def _monarch_dense_kernel(x_ref, w1_ref, w2_ref, o_ref):
    """out_tile = (x_tile @ W1) @ W2 with f32 MXU accumulation.

    x_ref:  (TB, in_features)
    w1_ref: (in_features, hidden)      hidden = out_dim[0] * in_dim[1]
    w2_ref: (hidden, out_features)
    o_ref:  (TB, out_features)
    """
    y = jnp.dot(x_ref[...], w1_ref[...],
                preferred_element_type=jnp.float32,
                precision=jax.lax.Precision.HIGHEST)
    z = jnp.dot(y.astype(w2_ref.dtype), w2_ref[...],
                preferred_element_type=jnp.float32,
                precision=jax.lax.Precision.HIGHEST)
    o_ref[...] = z.astype(o_ref.dtype)


def _build_dense_weights(R, L, in_dim, out_dim, permute_L, dtype):
    """Fold the monarch block structure and permutations into W1 / W2.

    y_flat = x_flat @ W1   with y_flat column index  m*i1 + j
    out    = y_flat @ W2   with torch's flatten(-2) column ordering.
    """
    i0, i1 = in_dim
    o0, o1 = out_dim
    in_features = i0 * i1
    hidden = o0 * i1
    out_features = o0 * o1

    # W1[j*i0 + k, m*i1 + j] = R[j, m, k]
    j = jnp.arange(i1)[:, None, None]
    m = jnp.arange(o0)[None, :, None]
    k = jnp.arange(i0)[None, None, :]
    W1 = jnp.zeros((in_features, hidden), dtype).at[
        j * i0 + k, m * i1 + j].set(R.astype(dtype))

    # permute_L=True : W2[n*i1 + j, i*o0 + n] = L[n, i, j]   (col = i*o0 + n)
    # permute_L=False: W2[n*i1 + j, n*o1 + i] = L[n, i, j]   (col = n*o1 + i)
    n = jnp.arange(o0)[:, None, None]
    i = jnp.arange(o1)[None, :, None]
    j = jnp.arange(i1)[None, None, :]
    rows = n * i1 + j
    cols = (i * o0 + n) if permute_L else (n * o1 + i)
    W2 = jnp.zeros((hidden, out_features), dtype).at[rows, cols].set(
        L.astype(dtype))
    return W1, W2


def monarch_forward(x, R, L, in_dim, out_dim, permute_L=True, block_b=512,
                    weight_dtype=None):
    i0, i1 = in_dim
    o0, o1 = out_dim
    in_features = i0 * i1
    hidden = o0 * i1
    out_features = o0 * o1
    assert R.shape == (i1, o0, i0)
    assert L.shape == (o0, o1, i1)
    assert x.shape[-1] == in_features

    wdtype = weight_dtype if weight_dtype is not None else x.dtype
    W1, W2 = _build_dense_weights(R, L, in_dim, out_dim, permute_L, wdtype)

    lead_shape = x.shape[:-1]
    x2 = x.reshape(-1, in_features)
    B = x2.shape[0]

    # Sublane-aligned batch tile (8 rows for f32, 16 for bf16), clamped to the
    # actual batch; pad the batch instead of asserting divisibility.
    sublane = 16 if x.dtype == jnp.bfloat16 else 8
    tb = max(sublane, _round_up(min(block_b, B), sublane))
    B_pad = _round_up(B, tb)
    if B_pad != B:
        x2 = jnp.pad(x2, ((0, B_pad - B), (0, 0)))

    grid = (B_pad // tb,)

    # VMEM: 2x(tb,in) + 2x(tb,out) double buffers + resident W1/W2; for the
    # small demo this is a few hundred KiB.  For very wide monarch configs,
    # lower block_b (esp. v7x: ~32 MiB scoped per TensorCore) or raise
    # vmem_limit_bytes here.
    out = pl.pallas_call(
        _monarch_dense_kernel,
        out_shape=jax.ShapeDtypeStruct((B_pad, out_features), x.dtype),
        grid_spec=pl.GridSpec(
            grid=grid,
            in_specs=[
                pl.BlockSpec((tb, in_features), lambda b: (b, 0)),
                pl.BlockSpec((in_features, hidden), lambda b: (0, 0)),
                pl.BlockSpec((hidden, out_features), lambda b: (0, 0)),
            ],
            out_specs=pl.BlockSpec((tb, out_features), lambda b: (b, 0)),
        ),
        compiler_params=pltpu.CompilerParams(
            dimension_semantics=("parallel",)),
    )(x2, W1, W2)

    if B_pad != B:
        out = out[:B]
    return out.reshape(*lead_shape, out_features)


def monarch_ref(x, R, L, in_dim, out_dim, permute_L=True):
    """Pure-JAX reference mirroring the torch forward exactly."""
    i0, i1 = in_dim
    x3 = x.reshape(*x.shape[:-1], i1, i0)
    y = jnp.einsum('nij,...nj->...in', R, x3,
                   precision=jax.lax.Precision.HIGHEST)
    if permute_L:
        z = jnp.einsum('nij,...nj->...in', L, y,
                       precision=jax.lax.Precision.HIGHEST)
    else:
        z = jnp.einsum('nij,...nj->...ni', L, y,
                       precision=jax.lax.Precision.HIGHEST)
    return z.reshape(*z.shape[:-2], -1)


if __name__ == "__main__":
    key = jax.random.PRNGKey(0)
    in_dim = (16, 8)    # in_features  = 128
    out_dim = (16, 8)   # out_features = 128

    k_x, k_r, k_l = jax.random.split(key, 3)
    R = jax.random.normal(k_r, (in_dim[1], out_dim[0], in_dim[0]), jnp.float32)
    L = jax.random.normal(k_l, (out_dim[0], out_dim[1], in_dim[1]), jnp.float32)
    x = jax.random.normal(k_x, (2, 8, in_dim[0] * in_dim[1]), jnp.float32)

    ok = True
    for permute_L in (True, False):
        out = monarch_forward(x, R, L, in_dim, out_dim, permute_L=permute_L)
        jax.block_until_ready(out)
        ref = monarch_ref(x, R, L, in_dim, out_dim, permute_L=permute_L)
        ok = ok and bool(jnp.allclose(out, ref, atol=1e-3, rtol=1e-3))

    print("KERNEL_OK" if ok else "MISMATCH")
</pallas_src>

<mosaic_0001>
module attributes {stable_mosaic.version = 11 : i64} {
  func.func @_monarch_dense_kernel(%arg0: i32, %arg1: memref<16x128xf32, #tpu.memory_space<vmem>>, %arg2: memref<128x128xf32, #tpu.memory_space<vmem>>, %arg3: memref<128x128xf32, #tpu.memory_space<vmem>>, %arg4: memref<16x128xf32, #tpu.memory_space<vmem>>) attributes {dimension_semantics = [#tpu.dimension_semantics<parallel>], iteration_bounds = array<i64: 1>, scalar_prefetch = 0 : i64, scratch_operands = 0 : i64, tpu.core_type = #tpu.core_type<tc>, window_params = [{transform_indices = @transform_0, window_bounds = array<i64: 16, 128>}, {pipeline_mode = #tpu.pipeline_mode<synchronous>, transform_indices = @transform_1, window_bounds = array<i64: 128, 128>}, {pipeline_mode = #tpu.pipeline_mode<synchronous>, transform_indices = @transform_2, window_bounds = array<i64: 128, 128>}, {transform_indices = @transform_3, window_bounds = array<i64: 16, 128>}]} {
    %c0 = arith.constant 0 : index
    %c0_0 = arith.constant 0 : index
    %0 = vector.load %arg1[%c0, %c0_0] : memref<16x128xf32, #tpu.memory_space<vmem>>, vector<16x128xf32>
    %c0_1 = arith.constant 0 : index
    %c0_2 = arith.constant 0 : index
    %1 = vector.load %arg2[%c0_1, %c0_2] : memref<128x128xf32, #tpu.memory_space<vmem>>, vector<128x128xf32>
    %cst = arith.constant dense<0.000000e+00> : vector<16x128xf32>
    %2 = tpu.matmul %0, %1, %cst {dimension_numbers = #tpu.dot_dimension_numbers<[1], [0], [0], [1], [0, 0, 1, 1], [], []>, precision = #tpu.contract_precision<fp32>} : vector<16x128xf32>, vector<128x128xf32>, vector<16x128xf32> -> vector<16x128xf32>
    %c0_3 = arith.constant 0 : index
    %c0_4 = arith.constant 0 : index
    %3 = vector.load %arg3[%c0_3, %c0_4] : memref<128x128xf32, #tpu.memory_space<vmem>>, vector<128x128xf32>
    %cst_5 = arith.constant dense<0.000000e+00> : vector<16x128xf32>
    %4 = tpu.matmul %2, %3, %cst_5 {dimension_numbers = #tpu.dot_dimension_numbers<[1], [0], [0], [1], [0, 0, 1, 1], [], []>, precision = #tpu.contract_precision<fp32>} : vector<16x128xf32>, vector<128x128xf32>, vector<16x128xf32> -> vector<16x128xf32>
    %c0_6 = arith.constant 0 : index
    %c0_7 = arith.constant 0 : index
    %5 = vector.load %arg4[%c0_6, %c0_7] : memref<16x128xf32, #tpu.memory_space<vmem>>, vector<16x128xf32>
    tpu.vector_store %arg4[%c0_6, %c0_7], %4 {strides = array<i32>} : memref<16x128xf32, #tpu.memory_space<vmem>>, vector<16x128xf32>,
    return
  }
  func.func @transform_0(%arg0: i32) -> (i32, i32) {
    %c0_i32 = arith.constant 0 : i32
    %c0_i32_0 = arith.constant 0 : i32
    return %arg0, %c0_i32 : i32, i32
  }
  func.func @transform_1(%arg0: i32) -> (i32, i32) {
    %c0_i32 = arith.constant 0 : i32
    %c0_i32_0 = arith.constant 0 : i32
    %c0_i32_1 = arith.constant 0 : i32
    return %c0_i32, %c0_i32_0 : i32, i32
  }
  func.func @transform_2(%arg0: i32) -> (i32, i32) {
    %c0_i32 = arith.constant 0 : i32
    %c0_i32_0 = arith.constant 0 : i32
    %c0_i32_1 = arith.constant 0 : i32
    return %c0_i32, %c0_i32_0 : i32, i32
  }
  func.func @transform_3(%arg0: i32) -> (i32, i32) {
    %c0_i32 = arith.constant 0 : i32
    %c0_i32_0 = arith.constant 0 : i32
    return %arg0, %c0_i32 : i32, i32
  }
}

</mosaic_0001>

<llo_original>
// kernel: tpu_custom_call.1
$region0: #{tpu_custom_call.1}
  #allocation0 [shape = 'u32[]', space=smem, size = 0x4, offset = 0x4, fixed_abs, tag = 'smem constant byte address 0x4 - core index']
  #allocation1 [shape = 'u32[144,128]{1,0:T(1,128)}', space=vmem, size = 0x12000, scoped, tag = 'internal scratch']
  %s0 = inlined_call_operand.hbm [shape: f32[16,128], index: 0, kind: input, shape index: {}]
  %s1 = inlined_call_operand.hbm [shape: f32[128,128], index: 1, kind: input, shape index: {}]
  %s2 = inlined_call_operand.hbm [shape: f32[128,128], index: 2, kind: input, shape index: {}]
  %s3 = inlined_call_operand.hbm [shape: f32[16,128], index: 3, kind: output, shape index: {}]
  %s4 = sld [smem:[#allocation0]]
  $region34: #{tpu_custom_call.1} parent=0
    _
  %s6 = ssub.s32 1, %s4
  %s7 = scalar_select 0, %s6, %s4
  $region1: #{tpu_custom_call.1} parent=0
    #allocation2 [shape = 'u8[8192]{0}', space=vmem, size = 0x2000, scoped, tag = 'input window, operand 0, single buffered']
    #allocation3 [shape = 's32[1]{0}', space=sflag, size = 0x4, scoped, tag = 'scoped memory for tpu_custom_call.1']
    #allocation4 [shape = 's32[1]{0}', space=sflag, size = 0x4, scoped, tag = 'scoped memory for tpu_custom_call.1']
    #allocation5 [shape = 'u8[65536]{0}', space=vmem, size = 0x10000, scoped, tag = 'input window, operand 1, single buffered']
    #allocation6 [shape = 's32[1]{0}', space=sflag, size = 0x4, scoped, tag = 'scoped memory for tpu_custom_call.1']
    #allocation7 [shape = 'u8[65536]{0}', space=vmem, size = 0x10000, scoped, tag = 'input window, operand 2, single buffered']
    #allocation8 [shape = 'u8[8192]{0}', space=vmem, size = 0x2000, scoped, tag = 'output window, operand 0, single buffered']
    %8 = vsyncpa [#allocation3], 0
    %9 = vsyncpa [#allocation6], 0
    %10 = vsyncpa [#allocation4], 0
    // Predicated region
    $region2: #{tpu_custom_call.1} parent=1 // pred_check
      _
    $region3: #{tpu_custom_call.1} parent=1 // pred_check_branch
      %12 = sbr.rel (0) target = $region5
    $region4: #{tpu_custom_call.1} parent=1 // pred_region
      %s14 = ssub.s32 256, 256
      %15 = vsyncadd [#allocation3], %s14
      %s16 = sshll.u32 [#allocation2], 4
      %s17 = int_to_ptr.vmem [resolvable:$true] %s16
      %22 = dma.hbm_to_vmem [thread:$0]  %s0, 256, %s17, [#allocation3], 128, 128, 8
    $region5: #{tpu_custom_call.1} parent=1 // pred_fallthru
      _
    // Predicated region
    $region6: #{tpu_custom_call.1} parent=1 // pred_check
      _
    $region7: #{tpu_custom_call.1} parent=1 // pred_check_branch
      %24 = sbr.rel (0) target = $region9
    $region8: #{tpu_custom_call.1} parent=1 // pred_region
      %s26 = ssub.s32 2048, 2048
      %27 = vsyncadd [#allocation6], %s26
      %s28 = sshll.u32 [#allocation5], 4
      %s29 = int_to_ptr.vmem [resolvable:$true] %s28
      %34 = dma.hbm_to_vmem [thread:$0]  %s1, 2048, %s29, [#allocation6], 128, 128, 8
    $region9: #{tpu_custom_call.1} parent=1 // pred_fallthru
      _
    // Predicated region
    $region10: #{tpu_custom_call.1} parent=1 // pred_check
      _
    $region11: #{tpu_custom_call.1} parent=1 // pred_check_branch
      %36 = sbr.rel (0) target = $region13
    $region12: #{tpu_custom_call.1} parent=1 // pred_region
      %s38 = ssub.s32 2048, 2048
      %39 = vsyncadd [#allocation6], %s38
      %s40 = sshll.u32 [#allocation7], 4
      %s41 = int_to_ptr.vmem [resolvable:$true] %s40
      %46 = dma.hbm_to_vmem [thread:$0]  %s2, 2048, %s41, [#allocation6], 128, 128, 8
    $region13: #{tpu_custom_call.1} parent=1 // pred_fallthru
      _
    // Predicated region
    $region14: #{tpu_custom_call.1} parent=1 // pred_check
      _
    $region15: #{tpu_custom_call.1} parent=1 // pred_check_branch
      %48 = sbr.rel (0) target = $region17
    $region16: #{tpu_custom_call.1} parent=1 // pred_region
      %49 = dma.done [#allocation3], 256
    $region17: #{tpu_custom_call.1} parent=1 // pred_fallthru
      _
    // Predicated region
    $region18: #{tpu_custom_call.1} parent=1 // pred_check
      _
    $region19: #{tpu_custom_call.1} parent=1 // pred_check_branch
      %51 = sbr.rel (0) target = $region21
    $region20: #{tpu_custom_call.1} parent=1 // pred_region
      %52 = dma.done [#allocation6], 2048
    $region21: #{tpu_custom_call.1} parent=1 // pred_fallthru
      _
    // Predicated region
    $region22: #{tpu_custom_call.1} parent=1 // pred_check
      _
    $region23: #{tpu_custom_call.1} parent=1 // pred_check_branch
      %54 = sbr.rel (0) target = $region25
    $region24: #{tpu_custom_call.1} parent=1 // pred_region
      %55 = dma.done [#allocation6], 2048
    $region25: #{tpu_custom_call.1} parent=1 // pred_fallthru
      _
    %v56 = vld [vmem:[#allocation2] sm:$0xff]
    %v57 = vld [vmem:[#allocation2 + $0x8] sm:$0xff]
    %v58 = vld [vmem:[#allocation5] sm:$0xff]
    %v59 = vld [vmem:[#allocation5 + $0x8] sm:$0xff]
    %v60 = vld [vmem:[#allocation5 + $0x10] sm:$0xff]
    %v61 = vld [vmem:[#allocation5 + $0x18] sm:$0xff]
    %v62 = vld [vmem:[#allocation5 + $0x20] sm:$0xff]
    %v63 = vld [vmem:[#allocation5 + $0x28] sm:$0xff]
    %v64 = vld [vmem:[#allocation5 + $0x30] sm:$0xff]
    %v65 = vld [vmem:[#allocation5 + $0x38] sm:$0xff]
    %v66 = vld [vmem:[#allocation5 + $0x40] sm:$0xff]
    %v67 = vld [vmem:[#allocation5 + $0x48] sm:$0xff]
    %v68 = vld [vmem:[#allocation5 + $0x50] sm:$0xff]
    %v69 = vld [vmem:[#allocation5 + $0x58] sm:$0xff]
    %v70 = vld [vmem:[#allocation5 + $0x60] sm:$0xff]
    %v71 = vld [vmem:[#allocation5 + $0x68] sm:$0xff]
    %v72 = vld [vmem:[#allocation5 + $0x70] sm:$0xff]
    %v73 = vld [vmem:[#allocation5 + $0x78] sm:$0xff]
    %74 = vmatprep.subr.mxu0 0.0
    %v75 = vand.u32 %v73, 4294901760
    %76 = vmatpush1.msra.mxu0 %v75
    %77 = vmatprep.subr.mxu0 0.0
    %v78 = vand.u32 %v72, 4294901760
    %79 = vmatpush1.msra.mxu0 %v78
    %80 = vmatprep.subr.mxu0 0.0
    %v81 = vand.u32 %v71, 4294901760
    %82 = vmatpush1.msra.mxu0 %v81
    %83 = vmatprep.subr.mxu0 0.0
    %v84 = vand.u32 %v70, 4294901760
    %85 = vmatpush1.msra.mxu0 %v84
    %86 = vmatprep.subr.mxu0 0.0
    %v87 = vand.u32 %v69, 4294901760
    %88 = vmatpush1.msra.mxu0 %v87
    %89 = vmatprep.subr.mxu0 0.0
    %v90 = vand.u32 %v68, 4294901760
    %91 = vmatpush1.msra.mxu0 %v90
    %92 = vmatprep.subr.mxu0 0.0
    %v93 = vand.u32 %v67, 4294901760
    %94 = vmatpush1.msra.mxu0 %v93
    %95 = vmatprep.subr.mxu0 0.0
    %v96 = vand.u32 %v66, 4294901760
    %97 = vmatpush1.msra.mxu0 %v96
    %98 = vmatprep.subr.mxu0 0.0
    %v99 = vand.u32 %v65, 4294901760
    %100 = vmatpush1.msra.mxu0 %v99
    %101 = vmatprep.subr.mxu0 0.0
    %v102 = vand.u32 %v64, 4294901760
    %103 = vmatpush1.msra.mxu0 %v102
    %104 = vmatprep.subr.mxu0 0.0
    %v105 = vand.u32 %v63, 4294901760
    %106 = vmatpush1.msra.mxu0 %v105
    %107 = vmatprep.subr.mxu0 0.0
    %v108 = vand.u32 %v62, 4294901760
    %109 = vmatpush1.msra.mxu0 %v108
    %110 = vmatprep.subr.mxu0 0.0
    %v111 = vand.u32 %v61, 4294901760
    %112 = vmatpush1.msra.mxu0 %v111
    %113 = vmatprep.subr.mxu0 0.0
    %v114 = vand.u32 %v60, 4294901760
    %115 = vmatpush1.msra.mxu0 %v114
    %116 = vmatprep.subr.mxu0 0.0
    %v117 = vand.u32 %v59, 4294901760
    %118 = vmatpush1.msra.mxu0 %v117
    %119 = vmatprep.subr.mxu0 0.0
    %v120 = vand.u32 %v58, 4294901760
    %121 = vmatpush1.msra.mxu0 %v120
    %122 = vmatprep.subr.mxu0 0.0
    %123 = vmatpush2.msra.mxu0 0.0
    %124 = vmatprep.subr.mxu0 0.0
    %125 = vmatpush2.msra.mxu0 0.0
    %126 = vmatprep.subr.mxu0 0.0
    %127 = vmatpush2.msra.mxu0 0.0
    %128 = vmatprep.subr.mxu0 0.0
    %129 = vmatpush2.msra.mxu0 0.0
    %130 = vmatprep.subr.mxu0 0.0
    %131 = vmatpush2.msra.mxu0 0.0
    %132 = vmatprep.subr.mxu0 0.0
    %133 = vmatpush2.msra.mxu0 0.0
    %134 = vmatprep.subr.mxu0 0.0
    %135 = vmatpush2.msra.mxu0 0.0
    %136 = vmatprep.subr.mxu0 0.0
    %137 = vmatpush2.msra.mxu0 0.0
    %138 = vmatprep.subr.mxu0 0.0
    %139 = vmatpush2.msra.mxu0 0.0
    %140 = vmatprep.subr.mxu0 0.0
    %141 = vmatpush2.msra.mxu0 0.0
    %142 = vmatprep.subr.mxu0 0.0
    %143 = vmatpush2.msra.mxu0 0.0
    %144 = vmatprep.subr.mxu0 0.0
    %145 = vmatpush2.msra.mxu0 0.0
    %146 = vmatprep.subr.mxu0 0.0
    %147 = vmatpush2.msra.mxu0 0.0
    %148 = vmatprep.subr.mxu0 0.0
    %149 = vmatpush2.msra.mxu0 0.0
    %150 = vmatprep.subr.mxu0 0.0
    %151 = vmatpush2.msra.mxu0 0.0
    %152 = vmatprep.subr.mxu0 0.0
    %153 = vmatpush2.msra.mxu0 0.0
    %154 = vmatprep.mubr.f32.mxu0 0.0
    %v155 = vand.u32 %v56, 4294901760
    %v156 = vsub.f32 %v56, %v155
    %v157 = vand.u32 %v156, 4294901760
    %v158 = vsub.f32 %v156, %v157
    %v159 = vand.u32 %v158, 4294901760
    %160 = vmatmul.mubr.f32.gmra.mxu0 %v159
    %v161 = vpop.f32.mrf.mxu0
    %v162 = vadd.f32 0.0, %v161
    %v163 = vpop.f32.mrf.mxu0
    %164 = vmatprep.mubr.f32.mxu0 0.0
    %v165 = vand.u32 %v57, 4294901760
    %v166 = vsub.f32 %v57, %v165
    %v167 = vand.u32 %v166, 4294901760
    %v168 = vsub.f32 %v166, %v167
    %v169 = vand.u32 %v168, 4294901760
    %170 = vmatmul.mubr.f32.gmra.mxu0 %v169
    %v171 = vpop.f32.mrf.mxu0
    %v172 = vadd.f32 0.0, %v171
    %v173 = vpop.f32.mrf.mxu0
    %174 = vdwg.mxu0
    %175 = vmatprep.subr.mxu0 0.0
    %v176 = vand.u32 %v73, 4294901760
    %v177 = vsub.f32 %v73, %v176
    %v178 = vand.u32 %v177, 4294901760
    %v179 = vsub.f32 %v177, %v178
    %v180 = vand.u32 %v179, 4294901760
    %181 = vmatpush1.msra.mxu0 %v180
    %182 = vmatprep.subr.mxu0 0.0
    %v183 = vand.u32 %v72, 4294901760
    %v184 = vsub.f32 %v72, %v183
    %v185 = vand.u32 %v184, 4294901760
    %v186 = vsub.f32 %v184, %v185
    %v187 = vand.u32 %v186, 4294901760
    %188 = vmatpush1.msra.mxu0 %v187
    %189 = vmatprep.subr.mxu0 0.0
    %v190 = vand.u32 %v71, 4294901760
    %v191 = vsub.f32 %v71, %v190
    %v192 = vand.u32 %v191, 4294901760
    %v193 = vsub.f32 %v191, %v192
    %v194 = vand.u32 %v193, 4294901760
    %195 = vmatpush1.msra.mxu0 %v194
    %196 = vmatprep.subr.mxu0 0.0
    %v197 = vand.u32 %v70, 4294901760
    %v198 = vsub.f32 %v70, %v197
    %v199 = vand.u32 %v198, 4294901760
    %v200 = vsub.f32 %v198, %v199
    %v201 = vand.u32 %v200, 4294901760
    %202 = vmatpush1.msra.mxu0 %v201
    %203 = vmatprep.subr.mxu0 0.0
    %v204 = vand.u32 %v69, 4294901760
    %v205 = vsub.f32 %v69, %v204
    %v206 = vand.u32 %v205, 4294901760
    %v207 = vsub.f32 %v205, %v206
    %v208 = vand.u32 %v207, 4294901760
    %209 = vmatpush1.msra.mxu0 %v208
    %210 = vmatprep.subr.mxu0 0.0
    %v211 = vand.u32 %v68, 4294901760
    %v212 = vsub.f32 %v68, %v211
    %v213 = vand.u32 %v212, 4294901760
    %v214 = vsub.f32 %v212, %v213
    %v215 = vand.u32 %v214, 4294901760
    %216 = vmatpush1.msra.mxu0 %v215
    %217 = vmatprep.subr.mxu0 0.0
    %v218 = vand.u32 %v67, 4294901760
    %v219 = vsub.f32 %v67, %v218
    %v220 = vand.u32 %v219, 4294901760
    %v221 = vsub.f32 %v219, %v220
    %v222 = vand.u32 %v221, 4294901760
    %223 = vmatpush1.msra.mxu0 %v222
    %224 = vmatprep.subr.mxu0 0.0
    %v225 = vand.u32 %v66, 4294901760
    %v226 = vsub.f32 %v66, %v225
    %v227 = vand.u32 %v226, 4294901760
    %v228 = vsub.f32 %v226, %v227
    %v229 = vand.u32 %v228, 4294901760
    %230 = vmatpush1.msra.mxu0 %v229
    %231 = vmatprep.subr.mxu0 0.0
    %v232 = vand.u32 %v65, 4294901760
    %v233 = vsub.f32 %v65, %v232
    %v234 = vand.u32 %v233, 4294901760
    %v235 = vsub.f32 %v233, %v234
    %v236 = vand.u32 %v235, 4294901760
    %237 = vmatpush1.msra.mxu0 %v236
    %238 = vmatprep.subr.mxu0 0.0
    %v239 = vand.u32 %v64, 4294901760
    %v240 = vsub.f32 %v64, %v239
    %v241 = vand.u32 %v240, 4294901760
    %v242 = vsub.f32 %v240, %v241
    %v243 = vand.u32 %v242, 4294901760
    %244 = vmatpush1.msra.mxu0 %v243
    %245 = vmatprep.subr.mxu0 0.0
    %v246 = vand.u32 %v63, 4294901760
    %v247 = vsub.f32 %v63, %v246
    %v248 = vand.u32 %v247, 4294901760
    %v249 = vsub.f32 %v247, %v248
    %v250 = vand.u32 %v249, 4294901760
    %251 = vmatpush1.msra.mxu0 %v250
    %252 = vmatprep.subr.mxu0 0.0
    %v253 = vand.u32 %v62, 4294901760
    %v254 = vsub.f32 %v62, %v253
    %v255 = vand.u32 %v254, 4294901760
    %v256 = vsub.f32 %v254, %v255
    %v257 = vand.u32 %v256, 4294901760
    %258 = vmatpush1.msra.mxu0 %v257
    %259 = vmatprep.subr.mxu0 0.0
    %v260 = vand.u32 %v61, 4294901760
    %v261 = vsub.f32 %v61, %v260
    %v262 = vand.u32 %v261, 4294901760
    %v263 = vsub.f32 %v261, %v262
    %v264 = vand.u32 %v263, 4294901760
    %265 = vmatpush1.msra.mxu0 %v264
    %266 = vmatprep.subr.mxu0 0.0
    %v267 = vand.u32 %v60, 4294901760
    %v268 = vsub.f32 %v60, %v267
    %v269 = vand.u32 %v268, 4294901760
    %v270 = vsub.f32 %v268, %v269
    %v271 = vand.u32 %v270, 4294901760
    %272 = vmatpush1.msra.mxu0 %v271
    %273 = vmatprep.subr.mxu0 0.0
    %v274 = vand.u32 %v59, 4294901760
    %v275 = vsub.f32 %v59, %v274
    %v276 = vand.u32 %v275, 4294901760
    %v277 = vsub.f32 %v275, %v276
    %v278 = vand.u32 %v277, 4294901760
    %279 = vmatpush1.msra.mxu0 %v278
    %280 = vmatprep.subr.mxu0 0.0
    %v281 = vand.u32 %v58, 4294901760
    %v282 = vsub.f32 %v58, %v281
    %v283 = vand.u32 %v282, 4294901760
    %v284 = vsub.f32 %v282, %v283
    %v285 = vand.u32 %v284, 4294901760
    %286 = vmatpush1.msra.mxu0 %v285
    %287 = vmatprep.subr.mxu0 0.0
    %288 = vmatpush2.msra.mxu0 0.0
    %289 = vmatprep.subr.mxu0 0.0
    %290 = vmatpush2.msra.mxu0 0.0
    %291 = vmatprep.subr.mxu0 0.0
    %292 = vmatpush2.msra.mxu0 0.0
    %293 = vmatprep.subr.mxu0 0.0
    %294 = vmatpush2.msra.mxu0 0.0
    %295 = vmatprep.subr.mxu0 0.0
    %296 = vmatpush2.msra.mxu0 0.0
    %297 = vmatprep.subr.mxu0 0.0
    %298 = vmatpush2.msra.mxu0 0.0
    %299 = vmatprep.subr.mxu0 0.0
    %300 = vmatpush2.msra.mxu0 0.0
    %301 = vmatprep.subr.mxu0 0.0
    %302 = vmatpush2.msra.mxu0 0.0
    %303 = vmatprep.subr.mxu0 0.0
    %304 = vmatpush2.msra.mxu0 0.0
    %305 = vmatprep.subr.mxu0 0.0
    %306 = vmatpush2.msra.mxu0 0.0
    %307 = vmatprep.subr.mxu0 0.0
    %308 = vmatpush2.msra.mxu0 0.0
    %309 = vmatprep.subr.mxu0 0.0
    %310 = vmatpush2.msra.mxu0 0.0
    %311 = vmatprep.subr.mxu0 0.0
    %312 = vmatpush2.msra.mxu0 0.0
    %313 = vmatprep.subr.mxu0 0.0
    %314 = vmatpush2.msra.mxu0 0.0
    %315 = vmatprep.subr.mxu0 0.0
    %316 = vmatpush2.msra.mxu0 0.0
    %317 = vmatprep.subr.mxu0 0.0
    %318 = vmatpush2.msra.mxu0 0.0
    %319 = vmatprep.mubr.f32.mxu0 0.0
    %v320 = vand.u32 %v56, 4294901760
    %321 = vmatmul.mubr.f32.gmra.mxu0 %v320
    %v322 = vpop.f32.mrf.mxu0
    %v323 = vadd.f32 %v162, %v322
    %v324 = vpop.f32.mrf.mxu0
    %325 = vmatprep.mubr.f32.mxu0 0.0
    %v326 = vand.u32 %v57, 4294901760
    %327 = vmatmul.mubr.f32.gmra.mxu0 %v326
    %v328 = vpop.f32.mrf.mxu0
    %v329 = vadd.f32 %v172, %v328
    %v330 = vpop.f32.mrf.mxu0
    %331 = vdwg.mxu0
    %332 = vmatprep.subr.mxu0 0.0
    %v333 = vand.u32 %v73, 4294901760
    %v334 = vsub.f32 %v73, %v333
    %335 = vmatpush1.msra.mxu0 %v334
    %336 = vmatprep.subr.mxu0 0.0
    %v337 = vand.u32 %v72, 4294901760
    %v338 = vsub.f32 %v72, %v337
    %339 = vmatpush1.msra.mxu0 %v338
    %340 = vmatprep.subr.mxu0 0.0
    %v341 = vand.u32 %v71, 4294901760
    %v342 = vsub.f32 %v71, %v341
    %343 = vmatpush1.msra.mxu0 %v342
    %344 = vmatprep.subr.mxu0 0.0
    %v345 = vand.u32 %v70, 4294901760
    %v346 = vsub.f32 %v70, %v345
    %347 = vmatpush1.msra.mxu0 %v346
    %348 = vmatprep.subr.mxu0 0.0
    %v349 = vand.u32 %v69, 4294901760
    %v350 = vsub.f32 %v69, %v349
    %351 = vmatpush1.msra.mxu0 %v350
    %352 = vmatprep.subr.mxu0 0.0
    %v353 = vand.u32 %v68, 4294901760
    %v354 = vsub.f32 %v68, %v353
    %355 = vmatpush1.msra.mxu0 %v354
    %356 = vmatprep.subr.mxu0 0.0
    %v357 = vand.u32 %v67, 4294901760
    %v358 = vsub.f32 %v67, %v357
    %359 = vmatpush1.msra.mxu0 %v358
    %360 = vmatprep.subr.mxu0 0.0
    %v361 = vand.u32 %v66, 4294901760
    %v362 = vsub.f32 %v66, %v361
    %363 = vmatpush1.msra.mxu0 %v362
    %364 = vmatprep.subr.mxu0 0.0
    %v365 = vand.u32 %v65, 4294901760
    %v366 = vsub.f32 %v65, %v365
    %367 = vmatpush1.msra.mxu0 %v366
    %368 = vmatprep.subr.mxu0 0.0
    %v369 = vand.u32 %v64, 4294901760
    %v370 = vsub.f32 %v64, %v369
    %371 = vmatpush1.msra.mxu0 %v370
    %372 = vmatprep.subr.mxu0 0.0
    %v373 = vand.u32 %v63, 4294901760
    %v374 = vsub.f32 %v63, %v373
    %375 = vmatpush1.msra.mxu0 %v374
    %376 = vmatprep.subr.mxu0 0.0
    %v377 = vand.u32 %v62, 4294901760
    %v378 = vsub.f32 %v62, %v377
    %379 = vmatpush1.msra.mxu0 %v378
    %380 = vmatprep.subr.mxu0 0.0
    %v381 = vand.u32 %v61, 4294901760
    %v382 = vsub.f32 %v61, %v381
    %383 = vmatpush1.msra.mxu0 %v382
    %384 = vmatprep.subr.mxu0 0.0
    %v385 = vand.u32 %v60, 4294901760
    %v386 = vsub.f32 %v60, %v385
    %387 = vmatpush1.msra.mxu0 %v386
    %388 = vmatprep.subr.mxu0 0.0
    %v389 = vand.u32 %v59, 4294901760
    %v390 = vsub.f32 %v59, %v389
    %391 = vmatpush1.msra.mxu0 %v390
    %392 = vmatprep.subr.mxu0 0.0
    %v393 = vand.u32 %v58, 4294901760
    %v394 = vsub.f32 %v58, %v393
    %395 = vmatpush1.msra.mxu0 %v394
    %396 = vmatprep.subr.mxu0 0.0
    %397 = vmatpush2.msra.mxu0 0.0
    %398 = vmatprep.subr.mxu0 0.0
    %399 = vmatpush2.msra.mxu0 0.0
    %400 = vmatprep.subr.mxu0 0.0
    %401 = vmatpush2.msra.mxu0 0.0
    %402 = vmatprep.subr.mxu0 0.0
    %403 = vmatpush2.msra.mxu0 0.0
    %404 = vmatprep.subr.mxu0 0.0
    %405 = vmatpush2.msra.mxu0 0.0
    %406 = vmatprep.subr.mxu0 0.0
    %407 = vmatpush2.msra.mxu0 0.0
    %408 = vmatprep.subr.mxu0 0.0
    %409 = vmatpush2.msra.mxu0 0.0
    %410 = vmatprep.subr.mxu0 0.0
    %411 = vmatpush2.msra.mxu0 0.0
    %412 = vmatprep.subr.mxu0 0.0
    %413 = vmatpush2.msra.mxu0 0.0
    %414 = vmatprep.subr.mxu0 0.0
    %415 = vmatpush2.msra.mxu0 0.0
    %416 = vmatprep.subr.mxu0 0.0
    %417 = vmatpush2.msra.mxu0 0.0
    %418 = vmatprep.subr.mxu0 0.0
    %419 = vmatpush2.msra.mxu0 0.0
    %420 = vmatprep.subr.mxu0 0.0
    %421 = vmatpush2.msra.mxu0 0.0
    %422 = vmatprep.subr.mxu0 0.0
    %423 = vmatpush2.msra.mxu0 0.0
    %424 = vmatprep.subr.mxu0 0.0
    %425 = vmatpush2.msra.mxu0 0.0
    %426 = vmatprep.subr.mxu0 0.0
    %427 = vmatpush2.msra.mxu0 0.0
    %428 = vmatprep.mubr.f32.mxu0 0.0
    %v429 = vand.u32 %v56, 4294901760
    %v430 = vsub.f32 %v56, %v429
    %431 = vmatmul.mubr.f32.gmra.mxu0 %v430
    %v432 = vpop.f32.mrf.mxu0
    %v433 = vadd.f32 %v323, %v432
    %v434 = vpop.f32.mrf.mxu0
    %435 = vmatprep.mubr.f32.mxu0 0.0
    %v436 = vand.u32 %v57, 4294901760
    %v437 = vsub.f32 %v57, %v436
    %438 = vmatmul.mubr.f32.gmra.mxu0 %v437
    %v439 = vpop.f32.mrf.mxu0
    %v440 = vadd.f32 %v329, %v439
    %v441 = vpop.f32.mrf.mxu0
    %442 = vdwg.mxu0
    %443 = vmatprep.subr.mxu0 0.0
    %v444 = vand.u32 %v73, 4294901760
    %445 = vmatpush1.msra.mxu0 %v444
    %446 = vmatprep.subr.mxu0 0.0
    %v447 = vand.u32 %v72, 4294901760
    %448 = vmatpush1.msra.mxu0 %v447
    %449 = vmatprep.subr.mxu0 0.0
    %v450 = vand.u32 %v71, 4294901760
    %451 = vmatpush1.msra.mxu0 %v450
    %452 = vmatprep.subr.mxu0 0.0
    %v453 = vand.u32 %v70, 4294901760
    %454 = vmatpush1.msra.mxu0 %v453
    %455 = vmatprep.subr.mxu0 0.0
    %v456 = vand.u32 %v69, 4294901760
    %457 = vmatpush1.msra.mxu0 %v456
    %458 = vmatprep.subr.mxu0 0.0
    %v459 = vand.u32 %v68, 4294901760
    %460 = vmatpush1.msra.mxu0 %v459
    %461 = vmatprep.subr.mxu0 0.0
    %v462 = vand.u32 %v67, 4294901760
    %463 = vmatpush1.msra.mxu0 %v462
    %464 = vmatprep.subr.mxu0 0.0
    %v465 = vand.u32 %v66, 4294901760
    %466 = vmatpush1.msra.mxu0 %v465
    %467 = vmatprep.subr.mxu0 0.0
    %v468 = vand.u32 %v65, 4294901760
    %469 = vmatpush1.msra.mxu0 %v468
    %470 = vmatprep.subr.mxu0 0.0
    %v471 = vand.u32 %v64, 4294901760
    %472 = vmatpush1.msra.mxu0 %v471
    %473 = vmatprep.subr.mxu0 0.0
    %v474 = vand.u32 %v63, 4294901760
    %475 = vmatpush1.msra.mxu0 %v474
    %476 = vmatprep.subr.mxu0 0.0
    %v477 = vand.u32 %v62, 4294901760
    %478 = vmatpush1.msra.mxu0 %v477
    %479 = vmatprep.subr.mxu0 0.0
    %v480 = vand.u32 %v61, 4294901760
    %481 = vmatpush1.msra.mxu0 %v480
    %482 = vmatprep.subr.mxu0 0.0
    %v483 = vand.u32 %v60, 4294901760
    %484 = vmatpush1.msra.mxu0 %v483
    %485 = vmatprep.subr.mxu0 0.0
    %v486 = vand.u32 %v59, 4294901760
    %487 = vmatpush1.msra.mxu0 %v486
    %488 = vmatprep.subr.mxu0 0.0
    %v489 = vand.u32 %v58, 4294901760
    %490 = vmatpush1.msra.mxu0 %v489
    %491 = vmatprep.subr.mxu0 0.0
    %492 = vmatpush2.msra.mxu0 0.0
    %493 = vmatprep.subr.mxu0 0.0
    %494 = vmatpush2.msra.mxu0 0.0
    %495 = vmatprep.subr.mxu0 0.0
    %496 = vmatpush2.msra.mxu0 0.0
    %497 = vmatprep.subr.mxu0 0.0
    %498 = vmatpush2.msra.mxu0 0.0
    %499 = vmatprep.subr.mxu0 0.0
    %500 = vmatpush2.msra.mxu0 0.0
    %501 = vmatprep.subr.mxu0 0.0
    %502 = vmatpush2.msra.mxu0 0.0
    %503 = vmatprep.subr.mxu0 0.0
    %504 = vmatpush2.msra.mxu0 0.0
    %505 = vmatprep.subr.mxu0 0.0
    %506 = vmatpush2.msra.mxu0 0.0
    %507 = vmatprep.subr.mxu0 0.0
    %508 = vmatpush2.msra.mxu0 0.0
    %509 = vmatprep.subr.mxu0 0.0
    %510 = vmatpush2.msra.mxu0 0.0
    %511 = vmatprep.subr.mxu0 0.0
    %512 = vmatpush2.msra.mxu0 0.0
    %513 = vmatprep.subr.mxu0 0.0
    %514 = vmatpush2.msra.mxu0 0.0
    %515 = vmatprep.subr.mxu0 0.0
    %516 = vmatpush2.msra.mxu0 0.0
    %517 = vmatprep.subr.mxu0 0.0
    %518 = vmatpush2.msra.mxu0 0.0
    %519 = vmatprep.subr.mxu0 0.0
    %520 = vmatpush2.msra.mxu0 0.0
    %521 = vmatprep.subr.mxu0 0.0
    %522 = vmatpush2.msra.mxu0 0.0
    %523 = vmatprep.mubr.f32.mxu0 0.0
    %v524 = vand.u32 %v56, 4294901760
    %v525 = vsub.f32 %v56, %v524
    %v526 = vand.u32 %v525, 4294901760
    %527 = vmatmul.mubr.f32.gmra.mxu0 %v526
    %v528 = vpop.f32.mrf.mxu0
    %v529 = vadd.f32 %v433, %v528
    %v530 = vpop.f32.mrf.mxu0
    %531 = vmatprep.mubr.f32.mxu0 0.0
    %v532 = vand.u32 %v57, 4294901760
    %v533 = vsub.f32 %v57, %v532
    %v534 = vand.u32 %v533, 4294901760
    %535 = vmatmul.mubr.f32.gmra.mxu0 %v534
    %v536 = vpop.f32.mrf.mxu0
    %v537 = vadd.f32 %v440, %v536
    %v538 = vpop.f32.mrf.mxu0
    %539 = vdwg.mxu0
    %540 = vmatprep.subr.mxu0 0.0
    %v541 = vand.u32 %v73, 4294901760
    %v542 = vsub.f32 %v73, %v541
    %v543 = vand.u32 %v542, 4294901760
    %544 = vmatpush1.msra.mxu0 %v543
    %545 = vmatprep.subr.mxu0 0.0
    %v546 = vand.u32 %v72, 4294901760
    %v547 = vsub.f32 %v72, %v546
    %v548 = vand.u32 %v547, 4294901760
    %549 = vmatpush1.msra.mxu0 %v548
    %550 = vmatprep.subr.mxu0 0.0
    %v551 = vand.u32 %v71, 4294901760
    %v552 = vsub.f32 %v71, %v551
    %v553 = vand.u32 %v552, 4294901760
    %554 = vmatpush1.msra.mxu0 %v553
    %555 = vmatprep.subr.mxu0 0.0
    %v556 = vand.u32 %v70, 4294901760
    %v557 = vsub.f32 %v70, %v556
    %v558 = vand.u32 %v557, 4294901760
    %559 = vmatpush1.msra.mxu0 %v558
    %560 = vmatprep.subr.mxu0 0.0
    %v561 = vand.u32 %v69, 4294901760
    %v562 = vsub.f32 %v69, %v561
    %v563 = vand.u32 %v562, 4294901760
    %564 = vmatpush1.msra.mxu0 %v563
    %565 = vmatprep.subr.mxu0 0.0
    %v566 = vand.u32 %v68, 4294901760
    %v567 = vsub.f32 %v68, %v566
    %v568 = vand.u32 %v567, 4294901760
    %569 = vmatpush1.msra.mxu0 %v568
    %570 = vmatprep.subr.mxu0 0.0
    %v571 = vand.u32 %v67, 4294901760
    %v572 = vsub.f32 %v67, %v571
    %v573 = vand.u32 %v572, 4294901760
    %574 = vmatpush1.msra.mxu0 %v573
    %575 = vmatprep.subr.mxu0 0.0
    %v576 = vand.u32 %v66, 4294901760
    %v577 = vsub.f32 %v66, %v576
    %v578 = vand.u32 %v577, 4294901760
    %579 = vmatpush1.msra.mxu0 %v578
    %580 = vmatprep.subr.mxu0 0.0
    %v581 = vand.u32 %v65, 4294901760
    %v582 = vsub.f32 %v65, %v581
    %v583 = vand.u32 %v582, 4294901760
    %584 = vmatpush1.msra.mxu0 %v583
    %585 = vmatprep.subr.mxu0 0.0
    %v586 = vand.u32 %v64, 4294901760
    %v587 = vsub.f32 %v64, %v586
    %v588 = vand.u32 %v587, 4294901760
    %589 = vmatpush1.msra.mxu0 %v588
    %590 = vmatprep.subr.mxu0 0.0
    %v591 = vand.u32 %v63, 4294901760
    %v592 = vsub.f32 %v63, %v591
    %v593 = vand.u32 %v592, 4294901760
    %594 = vmatpush1.msra.mxu0 %v593
    %595 = vmatprep.subr.mxu0 0.0
    %v596 = vand.u32 %v62, 4294901760
    %v597 = vsub.f32 %v62, %v596
    %v598 = vand.u32 %v597, 4294901760
    %599 = vmatpush1.msra.mxu0 %v598
    %600 = vmatprep.subr.mxu0 0.0
    %v601 = vand.u32 %v61, 4294901760
    %v602 = vsub.f32 %v61, %v601
    %v603 = vand.u32 %v602, 4294901760
    %604 = vmatpush1.msra.mxu0 %v603
    %605 = vmatprep.subr.mxu0 0.0
    %v606 = vand.u32 %v60, 4294901760
    %v607 = vsub.f32 %v60, %v606
    %v608 = vand.u32 %v607, 4294901760
    %609 = vmatpush1.msra.mxu0 %v608
    %610 = vmatprep.subr.mxu0 0.0
    %v611 = vand.u32 %v59, 4294901760
    %v612 = vsub.f32 %v59, %v611
    %v613 = vand.u32 %v612, 4294901760
    %614 = vmatpush1.msra.mxu0 %v613
    %615 = vmatprep.subr.mxu0 0.0
    %v616 = vand.u32 %v58, 4294901760
    %v617 = vsub.f32 %v58, %v616
    %v618 = vand.u32 %v617, 4294901760
    %619 = vmatpush1.msra.mxu0 %v618
    %620 = vmatprep.subr.mxu0 0.0
    %621 = vmatpush2.msra.mxu0 0.0
    %622 = vmatprep.subr.mxu0 0.0
    %623 = vmatpush2.msra.mxu0 0.0
    %624 = vmatprep.subr.mxu0 0.0
    %625 = vmatpush2.msra.mxu0 0.0
    %626 = vmatprep.subr.mxu0 0.0
    %627 = vmatpush2.msra.mxu0 0.0
    %628 = vmatprep.subr.mxu0 0.0
    %629 = vmatpush2.msra.mxu0 0.0
    %630 = vmatprep.subr.mxu0 0.0
    %631 = vmatpush2.msra.mxu0 0.0
    %632 = vmatprep.subr.mxu0 0.0
    %633 = vmatpush2.msra.mxu0 0.0
    %634 = vmatprep.subr.mxu0 0.0
    %635 = vmatpush2.msra.mxu0 0.0
    %636 = vmatprep.subr.mxu0 0.0
    %637 = vmatpush2.msra.mxu0 0.0
    %638 = vmatprep.subr.mxu0 0.0
    %639 = vmatpush2.msra.mxu0 0.0
    %640 = vmatprep.subr.mxu0 0.0
    %641 = vmatpush2.msra.mxu0 0.0
    %642 = vmatprep.subr.mxu0 0.0
    %643 = vmatpush2.msra.mxu0 0.0
    %644 = vmatprep.subr.mxu0 0.0
    %645 = vmatpush2.msra.mxu0 0.0
    %646 = vmatprep.subr.mxu0 0.0
    %647 = vmatpush2.msra.mxu0 0.0
    %648 = vmatprep.subr.mxu0 0.0
    %649 = vmatpush2.msra.mxu0 0.0
    %650 = vmatprep.subr.mxu0 0.0
    %651 = vmatpush2.msra.mxu0 0.0
    %652 = vmatprep.mubr.f32.mxu0 0.0
    %v653 = vand.u32 %v56, 4294901760
    %654 = vmatmul.mubr.f32.gmra.mxu0 %v653
    %v655 = vpop.f32.mrf.mxu0
    %v656 = vadd.f32 %v529, %v655
    %v657 = vpop.f32.mrf.mxu0
    %658 = vmatprep.mubr.f32.mxu0 0.0
    %v659 = vand.u32 %v57, 4294901760
    %660 = vmatmul.mubr.f32.gmra.mxu0 %v659
    %v661 = vpop.f32.mrf.mxu0
    %v662 = vadd.f32 %v537, %v661
    %v663 = vpop.f32.mrf.mxu0
    %664 = vdwg.mxu0
    %665 = vmatprep.subr.mxu0 0.0
    %v666 = vand.u32 %v73, 4294901760
    %667 = vmatpush1.msra.mxu0 %v666
    %668 = vmatprep.subr.mxu0 0.0
    %v669 = vand.u32 %v72, 4294901760
    %670 = vmatpush1.msra.mxu0 %v669
    %671 = vmatprep.subr.mxu0 0.0
    %v672 = vand.u32 %v71, 4294901760
    %673 = vmatpush1.msra.mxu0 %v672
    %674 = vmatprep.subr.mxu0 0.0
    %v675 = vand.u32 %v70, 4294901760
    %676 = vmatpush1.msra.mxu0 %v675
    %677 = vmatprep.subr.mxu0 0.0
    %v678 = vand.u32 %v69, 4294901760
    %679 = vmatpush1.msra.mxu0 %v678
    %680 = vmatprep.subr.mxu0 0.0
    %v681 = vand.u32 %v68, 4294901760
    %682 = vmatpush1.msra.mxu0 %v681
    %683 = vmatprep.subr.mxu0 0.0
    %v684 = vand.u32 %v67, 4294901760
    %685 = vmatpush1.msra.mxu0 %v684
    %686 = vmatprep.subr.mxu0 0.0
    %v687 = vand.u32 %v66, 4294901760
    %688 = vmatpush1.msra.mxu0 %v687
    %689 = vmatprep.subr.mxu0 0.0
    %v690 = vand.u32 %v65, 4294901760
    %691 = vmatpush1.msra.mxu0 %v690
    %692 = vmatprep.subr.mxu0 0.0
    %v693 = vand.u32 %v64, 4294901760
    %694 = vmatpush1.msra.mxu0 %v693
    %695 = vmatprep.subr.mxu0 0.0
    %v696 = vand.u32 %v63, 4294901760
    %697 = vmatpush1.msra.mxu0 %v696
    %698 = vmatprep.subr.mxu0 0.0
    %v699 = vand.u32 %v62, 4294901760
    %700 = vmatpush1.msra.mxu0 %v699
    %701 = vmatprep.subr.mxu0 0.0
    %v702 = vand.u32 %v61, 4294901760
    %703 = vmatpush1.msra.mxu0 %v702
    %704 = vmatprep.subr.mxu0 0.0
    %v705 = vand.u32 %v60, 4294901760
    %706 = vmatpush1.msra.mxu0 %v705
    %707 = vmatprep.subr.mxu0 0.0
    %v708 = vand.u32 %v59, 4294901760
    %709 = vmatpush1.msra.mxu0 %v708
    %710 = vmatprep.subr.mxu0 0.0
    %v711 = vand.u32 %v58, 4294901760
    %712 = vmatpush1.msra.mxu0 %v711
    %713 = vmatprep.subr.mxu0 0.0
    %714 = vmatpush2.msra.mxu0 0.0
    %715 = vmatprep.subr.mxu0 0.0
    %716 = vmatpush2.msra.mxu0 0.0
    %717 = vmatprep.subr.mxu0 0.0
    %718 = vmatpush2.msra.mxu0 0.0
    %719 = vmatprep.subr.mxu0 0.0
    %720 = vmatpush2.msra.mxu0 0.0
    %721 = vmatprep.subr.mxu0 0.0
    %722 = vmatpush2.msra.mxu0 0.0
    %723 = vmatprep.subr.mxu0 0.0
    %724 = vmatpush2.msra.mxu0 0.0
    %725 = vmatprep.subr.mxu0 0.0
    %726 = vmatpush2.msra.mxu0 0.0
    %727 = vmatprep.subr.mxu0 0.0
    %728 = vmatpush2.msra.mxu0 0.0
    %729 = vmatprep.subr.mxu0 0.0
    %730 = vmatpush2.msra.mxu0 0.0
    %731 = vmatprep.subr.mxu0 0.0
    %732 = vmatpush2.msra.mxu0 0.0
    %733 = vmatprep.subr.mxu0 0.0
    %734 = vmatpush2.msra.mxu0 0.0
    %735 = vmatprep.subr.mxu0 0.0
    %736 = vmatpush2.msra.mxu0 0.0
    %737 = vmatprep.subr.mxu0 0.0
    %738 = vmatpush2.msra.mxu0 0.0
    %739 = vmatprep.subr.mxu0 0.0
    %740 = vmatpush2.msra.mxu0 0.0
    %741 = vmatprep.subr.mxu0 0.0
    %742 = vmatpush2.msra.mxu0 0.0
    %743 = vmatprep.subr.mxu0 0.0
    %744 = vmatpush2.msra.mxu0 0.0
    %745 = vmatprep.mubr.f32.mxu0 0.0
    %v746 = vand.u32 %v56, 4294901760
    %747 = vmatmul.mubr.f32.gmra.mxu0 %v746
    %v748 = vpop.f32.mrf.mxu0
    %v749 = vadd.f32 %v656, %v748
    %v750 = vpop.f32.mrf.mxu0
    %751 = vmatprep.mubr.f32.mxu0 0.0
    %v752 = vand.u32 %v57, 4294901760
    %753 = vmatmul.mubr.f32.gmra.mxu0 %v752
    %v754 = vpop.f32.mrf.mxu0
    %v755 = vadd.f32 %v662, %v754
    %v756 = vpop.f32.mrf.mxu0
    %757 = vdwg.mxu0
    %v758 = vld [vmem:[#allocation7] sm:$0xff]
    %v759 = vld [vmem:[#allocation7 + $0x8] sm:$0xff]
    %v760 = vld [vmem:[#allocation7 + $0x10] sm:$0xff]
    %v761 = vld [vmem:[#allocation7 + $0x18] sm:$0xff]
    %v762 = vld [vmem:[#allocation7 + $0x20] sm:$0xff]
    %v763 = vld [vmem:[#allocation7 + $0x28] sm:$0xff]
    %v764 = vld [vmem:[#allocation7 + $0x30] sm:$0xff]
    %v765 = vld [vmem:[#allocation7 + $0x38] sm:$0xff]
    %v766 = vld [vmem:[#allocation7 + $0x40] sm:$0xff]
    %v767 = vld [vmem:[#allocation7 + $0x48] sm:$0xff]
    %v768 = vld [vmem:[#allocation7 + $0x50] sm:$0xff]
    %v769 = vld [vmem:[#allocation7 + $0x58] sm:$0xff]
    %v770 = vld [vmem:[#allocation7 + $0x60] sm:$0xff]
    %v771 = vld [vmem:[#allocation7 + $0x68] sm:$0xff]
    %v772 = vld [vmem:[#allocation7 + $0x70] sm:$0xff]
    %v773 = vld [vmem:[#allocation7 + $0x78] sm:$0xff]
    %774 = vmatprep.subr.mxu0 0.0
    %v775 = vand.u32 %v773, 4294901760
    %776 = vmatpush1.msra.mxu0 %v775
    %777 = vmatprep.subr.mxu0 0.0
    %v778 = vand.u32 %v772, 4294901760
    %779 = vmatpush1.msra.mxu0 %v778
    %780 = vmatprep.subr.mxu0 0.0
    %v781 = vand.u32 %v771, 4294901760
    %782 = vmatpush1.msra.mxu0 %v781
    %783 = vmatprep.subr.mxu0 0.0
    %v784 = vand.u32 %v770, 4294901760
    %785 = vmatpush1.msra.mxu0 %v784
    %786 = vmatprep.subr.mxu0 0.0
    %v787 = vand.u32 %v769, 4294901760
    %788 = vmatpush1.msra.mxu0 %v787
    %789 = vmatprep.subr.mxu0 0.0
    %v790 = vand.u32 %v768, 4294901760
    %791 = vmatpush1.msra.mxu0 %v790
    %792 = vmatprep.subr.mxu0 0.0
    %v793 = vand.u32 %v767, 4294901760
    %794 = vmatpush1.msra.mxu0 %v793
    %795 = vmatprep.subr.mxu0 0.0
    %v796 = vand.u32 %v766, 4294901760
    %797 = vmatpush1.msra.mxu0 %v796
    %798 = vmatprep.subr.mxu0 0.0
    %v799 = vand.u32 %v765, 4294901760
    %800 = vmatpush1.msra.mxu0 %v799
    %801 = vmatprep.subr.mxu0 0.0
    %v802 = vand.u32 %v764, 4294901760
    %803 = vmatpush1.msra.mxu0 %v802
    %804 = vmatprep.subr.mxu0 0.0
    %v805 = vand.u32 %v763, 4294901760
    %806 = vmatpush1.msra.mxu0 %v805
    %807 = vmatprep.subr.mxu0 0.0
    %v808 = vand.u32 %v762, 4294901760
    %809 = vmatpush1.msra.mxu0 %v808
    %810 = vmatprep.subr.mxu0 0.0
    %v811 = vand.u32 %v761, 4294901760
    %812 = vmatpush1.msra.mxu0 %v811
    %813 = vmatprep.subr.mxu0 0.0
    %v814 = vand.u32 %v760, 4294901760
    %815 = vmatpush1.msra.mxu0 %v814
    %816 = vmatprep.subr.mxu0 0.0
    %v817 = vand.u32 %v759, 4294901760
    %818 = vmatpush1.msra.mxu0 %v817
    %819 = vmatprep.subr.mxu0 0.0
    %v820 = vand.u32 %v758, 4294901760
    %821 = vmatpush1.msra.mxu0 %v820
    %822 = vmatprep.subr.mxu0 0.0
    %823 = vmatpush2.msra.mxu0 0.0
    %824 = vmatprep.subr.mxu0 0.0
    %825 = vmatpush2.msra.mxu0 0.0
    %826 = vmatprep.subr.mxu0 0.0
    %827 = vmatpush2.msra.mxu0 0.0
    %828 = vmatprep.subr.mxu0 0.0
    %829 = vmatpush2.msra.mxu0 0.0
    %830 = vmatprep.subr.mxu0 0.0
    %831 = vmatpush2.msra.mxu0 0.0
    %832 = vmatprep.subr.mxu0 0.0
    %833 = vmatpush2.msra.mxu0 0.0
    %834 = vmatprep.subr.mxu0 0.0
    %835 = vmatpush2.msra.mxu0 0.0
    %836 = vmatprep.subr.mxu0 0.0
    %837 = vmatpush2.msra.mxu0 0.0
    %838 = vmatprep.subr.mxu0 0.0
    %839 = vmatpush2.msra.mxu0 0.0
    %840 = vmatprep.subr.mxu0 0.0
    %841 = vmatpush2.msra.mxu0 0.0
    %842 = vmatprep.subr.mxu0 0.0
    %843 = vmatpush2.msra.mxu0 0.0
    %844 = vmatprep.subr.mxu0 0.0
    %845 = vmatpush2.msra.mxu0 0.0
    %846 = vmatprep.subr.mxu0 0.0
    %847 = vmatpush2.msra.mxu0 0.0
    %848 = vmatprep.subr.mxu0 0.0
    %849 = vmatpush2.msra.mxu0 0.0
    %850 = vmatprep.subr.mxu0 0.0
    %851 = vmatpush2.msra.mxu0 0.0
    %852 = vmatprep.subr.mxu0 0.0
    %853 = vmatpush2.msra.mxu0 0.0
    %854 = vmatprep.mubr.f32.mxu0 0.0
    %v855 = vand.u32 %v749, 4294901760
    %v856 = vsub.f32 %v749, %v855
    %v857 = vand.u32 %v856, 4294901760
    %v858 = vsub.f32 %v856, %v857
    %v859 = vand.u32 %v858, 4294901760
    %860 = vmatmul.mubr.f32.gmra.mxu0 %v859
    %v861 = vpop.f32.mrf.mxu0
    %v862 = vadd.f32 0.0, %v861
    %v863 = vpop.f32.mrf.mxu0
    %864 = vmatprep.mubr.f32.mxu0 0.0
    %v865 = vand.u32 %v755, 4294901760
    %v866 = vsub.f32 %v755, %v865
    %v867 = vand.u32 %v866, 4294901760
    %v868 = vsub.f32 %v866, %v867
    %v869 = vand.u32 %v868, 4294901760
    %870 = vmatmul.mubr.f32.gmra.mxu0 %v869
    %v871 = vpop.f32.mrf.mxu0
    %v872 = vadd.f32 0.0, %v871
    %v873 = vpop.f32.mrf.mxu0
    %874 = vdwg.mxu0
    %875 = vmatprep.subr.mxu0 0.0
    %v876 = vand.u32 %v773, 4294901760
    %v877 = vsub.f32 %v773, %v876
    %v878 = vand.u32 %v877, 4294901760
    %v879 = vsub.f32 %v877, %v878
    %v880 = vand.u32 %v879, 4294901760
    %881 = vmatpush1.msra.mxu0 %v880
    %882 = vmatprep.subr.mxu0 0.0
    %v883 = vand.u32 %v772, 4294901760
    %v884 = vsub.f32 %v772, %v883
    %v885 = vand.u32 %v884, 4294901760
    %v886 = vsub.f32 %v884, %v885
    %v887 = vand.u32 %v886, 4294901760
    %888 = vmatpush1.msra.mxu0 %v887
    %889 = vmatprep.subr.mxu0 0.0
    %v890 = vand.u32 %v771, 4294901760
    %v891 = vsub.f32 %v771, %v890
    %v892 = vand.u32 %v891, 4294901760
    %v893 = vsub.f32 %v891, %v892
    %v894 = vand.u32 %v893, 4294901760
    %895 = vmatpush1.msra.mxu0 %v894
    %896 = vmatprep.subr.mxu0 0.0
    %v897 = vand.u32 %v770, 4294901760
    %v898 = vsub.f32 %v770, %v897
    %v899 = vand.u32 %v898, 4294901760
    %v900 = vsub.f32 %v898, %v899
    %v901 = vand.u32 %v900, 4294901760
    %902 = vmatpush1.msra.mxu0 %v901
    %903 = vmatprep.subr.mxu0 0.0
    %v904 = vand.u32 %v769, 4294901760
    %v905 = vsub.f32 %v769, %v904
    %v906 = vand.u32 %v905, 4294901760
    %v907 = vsub.f32 %v905, %v906
    %v908 = vand.u32 %v907, 4294901760
    %909 = vmatpush1.msra.mxu0 %v908
    %910 = vmatprep.subr.mxu0 0.0
    %v911 = vand.u32 %v768, 4294901760
    %v912 = vsub.f32 %v768, %v911
    %v913 = vand.u32 %v912, 4294901760
    %v914 = vsub.f32 %v912, %v913
    %v915 = vand.u32 %v914, 4294901760
    %916 = vmatpush1.msra.mxu0 %v915
    %917 = vmatprep.subr.mxu0 0.0
    %v918 = vand.u32 %v767, 4294901760
    %v919 = vsub.f32 %v767, %v918
    %v920 = vand.u32 %v919, 4294901760
    %v921 = vsub.f32 %v919, %v920
    %v922 = vand.u32 %v921, 4294901760
    %923 = vmatpush1.msra.mxu0 %v922
    %924 = vmatprep.subr.mxu0 0.0
    %v925 = vand.u32 %v766, 4294901760
    %v926 = vsub.f32 %v766, %v925
    %v927 = vand.u32 %v926, 4294901760
    %v928 = vsub.f32 %v926, %v927
    %v929 = vand.u32 %v928, 4294901760
    %930 = vmatpush1.msra.mxu0 %v929
    %931 = vmatprep.subr.mxu0 0.0
    %v932 = vand.u32 %v765, 4294901760
    %v933 = vsub.f32 %v765, %v932
    %v934 = vand.u32 %v933, 4294901760
    %v935 = vsub.f32 %v933, %v934
    %v936 = vand.u32 %v935, 4294901760
    %937 = vmatpush1.msra.mxu0 %v936
    %938 = vmatprep.subr.mxu0 0.0
    %v939 = vand.u32 %v764, 4294901760
    %v940 = vsub.f32 %v764, %v939
    %v941 = vand.u32 %v940, 4294901760
    %v942 = vsub.f32 %v940, %v941
    %v943 = vand.u32 %v942, 4294901760
    %944 = vmatpush1.msra.mxu0 %v943
    %945 = vmatprep.subr.mxu0 0.0
    %v946 = vand.u32 %v763, 4294901760
    %v947 = vsub.f32 %v763, %v946
    %v948 = vand.u32 %v947, 4294901760
    %v949 = vsub.f32 %v947, %v948
    %v950 = vand.u32 %v949, 4294901760
    %951 = vmatpush1.msra.mxu0 %v950
    %952 = vmatprep.subr.mxu0 0.0
    %v953 = vand.u32 %v762, 4294901760
    %v954 = vsub.f32 %v762, %v953
    %v955 = vand.u32 %v954, 4294901760
    %v956 = vsub.f32 %v954, %v955
    %v957 = vand.u32 %v956, 4294901760
    %958 = vmatpush1.msra.mxu0 %v957
    %959 = vmatprep.subr.mxu0 0.0
    %v960 = vand.u32 %v761, 4294901760
    %v961 = vsub.f32 %v761, %v960
    %v962 = vand.u32 %v961, 4294901760
    %v963 = vsub.f32 %v961, %v962
    %v964 = vand.u32 %v963, 4294901760
    %965 = vmatpush1.msra.mxu0 %v964
    %966 = vmatprep.subr.mxu0 0.0
    %v967 = vand.u32 %v760, 4294901760
    %v968 = vsub.f32 %v760, %v967
    %v969 = vand.u32 %v968, 4294901760
    %v970 = vsub.f32 %v968, %v969
    %v971 = vand.u32 %v970, 4294901760
    %972 = vmatpush1.msra.mxu0 %v971
    %973 = vmatprep.subr.mxu0 0.0
    %v974 = vand.u32 %v759, 4294901760
    %v975 = vsub.f32 %v759, %v974
    %v976 = vand.u32 %v975, 4294901760
    %v977 = vsub.f32 %v975, %v976
    %v978 = vand.u32 %v977, 4294901760
    %979 = vmatpush1.msra.mxu0 %v978
    %980 = vmatprep.subr.mxu0 0.0
    %v981 = vand.u32 %v758, 4294901760
    %v982 = vsub.f32 %v758, %v981
    %v983 = vand.u32 %v982, 4294901760
    %v984 = vsub.f32 %v982, %v983
    %v985 = vand.u32 %v984, 4294901760
    %986 = vmatpush1.msra.mxu0 %v985
    %987 = vmatprep.subr.mxu0 0.0
    %988 = vmatpush2.msra.mxu0 0.0
    %989 = vmatprep.subr.mxu0 0.0
    %990 = vmatpush2.msra.mxu0 0.0
    %991 = vmatprep.subr.mxu0 0.0
    %992 = vmatpush2.msra.mxu0 0.0
    %993 = vmatprep.subr.mxu0 0.0
    %994 = vmatpush2.msra.mxu0 0.0
    %995 = vmatprep.subr.mxu0 0.0
    %996 = vmatpush2.msra.mxu0 0.0
    %997 = vmatprep.subr.mxu0 0.0
    %998 = vmatpush2.msra.mxu0 0.0
    %999 = vmatprep.subr.mxu0 0.0
    %1000 = vmatpush2.msra.mxu0 0.0
    %1001 = vmatprep.subr.mxu0 0.0
    %1002 = vmatpush2.msra.mxu0 0.0
    %1003 = vmatprep.subr.mxu0 0.0
    %1004 = vmatpush2.msra.mxu0 0.0
    %1005 = vmatprep.subr.mxu0 0.0
    %1006 = vmatpush2.msra.mxu0 0.0
    %1007 = vmatprep.subr.mxu0 0.0
    %1008 = vmatpush2.msra.mxu0 0.0
    %1009 = vmatprep.subr.mxu0 0.0
    %1010 = vmatpush2.msra.mxu0 0.0
    %1011 = vmatprep.subr.mxu0 0.0
    %1012 = vmatpush2.msra.mxu0 0.0
    %1013 = vmatprep.subr.mxu0 0.0
    %1014 = vmatpush2.msra.mxu0 0.0
    %1015 = vmatprep.subr.mxu0 0.0
    %1016 = vmatpush2.msra.mxu0 0.0
    %1017 = vmatprep.subr.mxu0 0.0
    %1018 = vmatpush2.msra.mxu0 0.0
    %1019 = vmatprep.mubr.f32.mxu0 0.0
    %v1020 = vand.u32 %v749, 4294901760
    %1021 = vmatmul.mubr.f32.gmra.mxu0 %v1020
    %v1022 = vpop.f32.mrf.mxu0
    %v1023 = vadd.f32 %v862, %v1022
    %v1024 = vpop.f32.mrf.mxu0
    %1025 = vmatprep.mubr.f32.mxu0 0.0
    %v1026 = vand.u32 %v755, 4294901760
    %1027 = vmatmul.mubr.f32.gmra.mxu0 %v1026
    %v1028 = vpop.f32.mrf.mxu0
    %v1029 = vadd.f32 %v872, %v1028
    %v1030 = vpop.f32.mrf.mxu0
    %1031 = vdwg.mxu0
    %1032 = vmatprep.subr.mxu0 0.0
    %v1033 = vand.u32 %v773, 4294901760
    %v1034 = vsub.f32 %v773, %v1033
    %1035 = vmatpush1.msra.mxu0 %v1034
    %1036 = vmatprep.subr.mxu0 0.0
    %v1037 = vand.u32 %v772, 4294901760
    %v1038 = vsub.f32 %v772, %v1037
    %1039 = vmatpush1.msra.mxu0 %v1038
    %1040 = vmatprep.subr.mxu0 0.0
    %v1041 = vand.u32 %v771, 4294901760
    %v1042 = vsub.f32 %v771, %v1041
    %1043 = vmatpush1.msra.mxu0 %v1042
    %1044 = vmatprep.subr.mxu0 0.0
    %v1045 = vand.u32 %v770, 4294901760
    %v1046 = vsub.f32 %v770, %v1045
    %1047 = vmatpush1.msra.mxu0 %v1046
    %1048 = vmatprep.subr.mxu0 0.0
    %v1049 = vand.u32 %v769, 4294901760
    %v1050 = vsub.f32 %v769, %v1049
    %1051 = vmatpush1.msra.mxu0 %v1050
    %1052 = vmatprep.subr.mxu0 0.0
    %v1053 = vand.u32 %v768, 4294901760
    %v1054 = vsub.f32 %v768, %v1053
    %1055 = vmatpush1.msra.mxu0 %v1054
    %1056 = vmatprep.subr.mxu0 0.0
    %v1057 = vand.u32 %v767, 4294901760
    %v1058 = vsub.f32 %v767, %v1057
    %1059 = vmatpush1.msra.mxu0 %v1058
    %1060 = vmatprep.subr.mxu0 0.0
    %v1061 = vand.u32 %v766, 4294901760
    %v1062 = vsub.f32 %v766, %v1061
    %1063 = vmatpush1.msra.mxu0 %v1062
    %1064 = vmatprep.subr.mxu0 0.0
    %v1065 = vand.u32 %v765, 4294901760
    %v1066 = vsub.f32 %v765, %v1065
    %1067 = vmatpush1.msra.mxu0 %v1066
    %1068 = vmatprep.subr.mxu0 0.0
    %v1069 = vand.u32 %v764, 4294901760
    %v1070 = vsub.f32 %v764, %v1069
    %1071 = vmatpush1.msra.mxu0 %v1070
    %1072 = vmatprep.subr.mxu0 0.0
    %v1073 = vand.u32 %v763, 4294901760
    %v1074 = vsub.f32 %v763, %v1073
    %1075 = vmatpush1.msra.mxu0 %v1074
    %1076 = vmatprep.subr.mxu0 0.0
    %v1077 = vand.u32 %v762, 4294901760
    %v1078 = vsub.f32 %v762, %v1077
    %1079 = vmatpush1.msra.mxu0 %v1078
    %1080 = vmatprep.subr.mxu0 0.0
    %v1081 = vand.u32 %v761, 4294901760
    %v1082 = vsub.f32 %v761, %v1081
    %1083 = vmatpush1.msra.mxu0 %v1082
    %1084 = vmatprep.subr.mxu0 0.0
    %v1085 = vand.u32 %v760, 4294901760
    %v1086 = vsub.f32 %v760, %v1085
    %1087 = vmatpush1.msra.mxu0 %v1086
    %1088 = vmatprep.subr.mxu0 0.0
    %v1089 = vand.u32 %v759, 4294901760
    %v1090 = vsub.f32 %v759, %v1089
    %1091 = vmatpush1.msra.mxu0 %v1090
    %1092 = vmatprep.subr.mxu0 0.0
    %v1093 = vand.u32 %v758, 4294901760
    %v1094 = vsub.f32 %v758, %v1093
    %1095 = vmatpush1.msra.mxu0 %v1094
    %1096 = vmatprep.subr.mxu0 0.0
    %1097 = vmatpush2.msra.mxu0 0.0
    %1098 = vmatprep.subr.mxu0 0.0
    %1099 = vmatpush2.msra.mxu0 0.0
    %1100 = vmatprep.subr.mxu0 0.0
    %1101 = vmatpush2.msra.mxu0 0.0
    %1102 = vmatprep.subr.mxu0 0.0
    %1103 = vmatpush2.msra.mxu0 0.0
    %1104 = vmatprep.subr.mxu0 0.0
    %1105 = vmatpush2.msra.mxu0 0.0
    %1106 = vmatprep.subr.mxu0 0.0
    %1107 = vmatpush2.msra.mxu0 0.0
    %1108 = vmatprep.subr.mxu0 0.0
    %1109 = vmatpush2.msra.mxu0 0.0
    %1110 = vmatprep.subr.mxu0 0.0
    %1111 = vmatpush2.msra.mxu0 0.0
    %1112 = vmatprep.subr.mxu0 0.0
    %1113 = vmatpush2.msra.mxu0 0.0
    %1114 = vmatprep.subr.mxu0 0.0
    %1115 = vmatpush2.msra.mxu0 0.0
    %1116 = vmatprep.subr.mxu0 0.0
    %1117 = vmatpush2.msra.mxu0 0.0
    %1118 = vmatprep.subr.mxu0 0.0
    %1119 = vmatpush2.msra.mxu0 0.0
    %1120 = vmatprep.subr.mxu0 0.0
    %1121 = vmatpush2.msra.mxu0 0.0
    %1122 = vmatprep.subr.mxu0 0.0
    %1123 = vmatpush2.msra.mxu0 0.0
    %1124 = vmatprep.subr.mxu0 0.0
    %1125 = vmatpush2.msra.mxu0 0.0
    %1126 = vmatprep.subr.mxu0 0.0
    %1127 = vmatpush2.msra.mxu0 0.0
    %1128 = vmatprep.mubr.f32.mxu0 0.0
    %v1129 = vand.u32 %v749, 4294901760
    %v1130 = vsub.f32 %v749, %v1129
    %1131 = vmatmul.mubr.f32.gmra.mxu0 %v1130
    %v1132 = vpop.f32.mrf.mxu0
    %v1133 = vadd.f32 %v1023, %v1132
    %v1134 = vpop.f32.mrf.mxu0
    %1135 = vmatprep.mubr.f32.mxu0 0.0
    %v1136 = vand.u32 %v755, 4294901760
    %v1137 = vsub.f32 %v755, %v1136
    %1138 = vmatmul.mubr.f32.gmra.mxu0 %v1137
    %v1139 = vpop.f32.mrf.mxu0
    %v1140 = vadd.f32 %v1029, %v1139
    %v1141 = vpop.f32.mrf.mxu0
    %1142 = vdwg.mxu0
    %1143 = vmatprep.subr.mxu0 0.0
    %v1144 = vand.u32 %v773, 4294901760
    %1145 = vmatpush1.msra.mxu0 %v1144
    %1146 = vmatprep.subr.mxu0 0.0
    %v1147 = vand.u32 %v772, 4294901760
    %1148 = vmatpush1.msra.mxu0 %v1147
    %1149 = vmatprep.subr.mxu0 0.0
    %v1150 = vand.u32 %v771, 4294901760
    %1151 = vmatpush1.msra.mxu0 %v1150
    %1152 = vmatprep.subr.mxu0 0.0
    %v1153 = vand.u32 %v770, 4294901760
    %1154 = vmatpush1.msra.mxu0 %v1153
    %1155 = vmatprep.subr.mxu0 0.0
    %v1156 = vand.u32 %v769, 4294901760
    %1157 = vmatpush1.msra.mxu0 %v1156
    %1158 = vmatprep.subr.mxu0 0.0
    %v1159 = vand.u32 %v768, 4294901760
    %1160 = vmatpush1.msra.mxu0 %v1159
    %1161 = vmatprep.subr.mxu0 0.0
    %v1162 = vand.u32 %v767, 4294901760
    %1163 = vmatpush1.msra.mxu0 %v1162
    %1164 = vmatprep.subr.mxu0 0.0
    %v1165 = vand.u32 %v766, 4294901760
    %1166 = vmatpush1.msra.mxu0 %v1165
    %1167 = vmatprep.subr.mxu0 0.0
    %v1168 = vand.u32 %v765, 4294901760
    %1169 = vmatpush1.msra.mxu0 %v1168
    %1170 = vmatprep.subr.mxu0 0.0
    %v1171 = vand.u32 %v764, 4294901760
    %1172 = vmatpush1.msra.mxu0 %v1171
    %1173 = vmatprep.subr.mxu0 0.0
    %v1174 = vand.u32 %v763, 4294901760
    %1175 = vmatpush1.msra.mxu0 %v1174
    %1176 = vmatprep.subr.mxu0 0.0
    %v1177 = vand.u32 %v762, 4294901760
    %1178 = vmatpush1.msra.mxu0 %v1177
    %1179 = vmatprep.subr.mxu0 0.0
    %v1180 = vand.u32 %v761, 4294901760
    %1181 = vmatpush1.msra.mxu0 %v1180
    %1182 = vmatprep.subr.mxu0 0.0
    %v1183 = vand.u32 %v760, 4294901760
    %1184 = vmatpush1.msra.mxu0 %v1183
    %1185 = vmatprep.subr.mxu0 0.0
    %v1186 = vand.u32 %v759, 4294901760
    %1187 = vmatpush1.msra.mxu0 %v1186
    %1188 = vmatprep.subr.mxu0 0.0
    %v1189 = vand.u32 %v758, 4294901760
    %1190 = vmatpush1.msra.mxu0 %v1189
    %1191 = vmatprep.subr.mxu0 0.0
    %1192 = vmatpush2.msra.mxu0 0.0
    %1193 = vmatprep.subr.mxu0 0.0
    %1194 = vmatpush2.msra.mxu0 0.0
    %1195 = vmatprep.subr.mxu0 0.0
    %1196 = vmatpush2.msra.mxu0 0.0
    %1197 = vmatprep.subr.mxu0 0.0
    %1198 = vmatpush2.msra.mxu0 0.0
    %1199 = vmatprep.subr.mxu0 0.0
    %1200 = vmatpush2.msra.mxu0 0.0
    %1201 = vmatprep.subr.mxu0 0.0
    %1202 = vmatpush2.msra.mxu0 0.0
    %1203 = vmatprep.subr.mxu0 0.0
    %1204 = vmatpush2.msra.mxu0 0.0
    %1205 = vmatprep.subr.mxu0 0.0
    %1206 = vmatpush2.msra.mxu0 0.0
    %1207 = vmatprep.subr.mxu0 0.0
    %1208 = vmatpush2.msra.mxu0 0.0
    %1209 = vmatprep.subr.mxu0 0.0
    %1210 = vmatpush2.msra.mxu0 0.0
    %1211 = vmatprep.subr.mxu0 0.0
    %1212 = vmatpush2.msra.mxu0 0.0
    %1213 = vmatprep.subr.mxu0 0.0
    %1214 = vmatpush2.msra.mxu0 0.0
    %1215 = vmatprep.subr.mxu0 0.0
    %1216 = vmatpush2.msra.mxu0 0.0
    %1217 = vmatprep.subr.mxu0 0.0
    %1218 = vmatpush2.msra.mxu0 0.0
    %1219 = vmatprep.subr.mxu0 0.0
    %1220 = vmatpush2.msra.mxu0 0.0
    %1221 = vmatprep.subr.mxu0 0.0
    %1222 = vmatpush2.msra.mxu0 0.0
    %1223 = vmatprep.mubr.f32.mxu0 0.0
    %v1224 = vand.u32 %v749, 4294901760
    %v1225 = vsub.f32 %v749, %v1224
    %v1226 = vand.u32 %v1225, 4294901760
    %1227 = vmatmul.mubr.f32.gmra.mxu0 %v1226
    %v1228 = vpop.f32.mrf.mxu0
    %v1229 = vadd.f32 %v1133, %v1228
    %v1230 = vpop.f32.mrf.mxu0
    %1231 = vmatprep.mubr.f32.mxu0 0.0
    %v1232 = vand.u32 %v755, 4294901760
    %v1233 = vsub.f32 %v755, %v1232
    %v1234 = vand.u32 %v1233, 4294901760
    %1235 = vmatmul.mubr.f32.gmra.mxu0 %v1234
    %v1236 = vpop.f32.mrf.mxu0
    %v1237 = vadd.f32 %v1140, %v1236
    %v1238 = vpop.f32.mrf.mxu0
    %1239 = vdwg.mxu0
    %1240 = vmatprep.subr.mxu0 0.0
    %v1241 = vand.u32 %v773, 4294901760
    %v1242 = vsub.f32 %v773, %v1241
    %v1243 = vand.u32 %v1242, 4294901760
    %1244 = vmatpush1.msra.mxu0 %v1243
    %1245 = vmatprep.subr.mxu0 0.0
    %v1246 = vand.u32 %v772, 4294901760
    %v1247 = vsub.f32 %v772, %v1246
    %v1248 = vand.u32 %v1247, 4294901760
    %1249 = vmatpush1.msra.mxu0 %v1248
    %1250 = vmatprep.subr.mxu0 0.0
    %v1251 = vand.u32 %v771, 4294901760
    %v1252 = vsub.f32 %v771, %v1251
    %v1253 = vand.u32 %v1252, 4294901760
    %1254 = vmatpush1.msra.mxu0 %v1253
    %1255 = vmatprep.subr.mxu0 0.0
    %v1256 = vand.u32 %v770, 4294901760
    %v1257 = vsub.f32 %v770, %v1256
    %v1258 = vand.u32 %v1257, 4294901760
    %1259 = vmatpush1.msra.mxu0 %v1258
    %1260 = vmatprep.subr.mxu0 0.0
    %v1261 = vand.u32 %v769, 4294901760
    %v1262 = vsub.f32 %v769, %v1261
    %v1263 = vand.u32 %v1262, 4294901760
    %1264 = vmatpush1.msra.mxu0 %v1263
    %1265 = vmatprep.subr.mxu0 0.0
    %v1266 = vand.u32 %v768, 4294901760
    %v1267 = vsub.f32 %v768, %v1266
    %v1268 = vand.u32 %v1267, 4294901760
    %1269 = vmatpush1.msra.mxu0 %v1268
    %1270 = vmatprep.subr.mxu0 0.0
    %v1271 = vand.u32 %v767, 4294901760
    %v1272 = vsub.f32 %v767, %v1271
    %v1273 = vand.u32 %v1272, 4294901760
    %1274 = vmatpush1.msra.mxu0 %v1273
    %1275 = vmatprep.subr.mxu0 0.0
    %v1276 = vand.u32 %v766, 4294901760
    %v1277 = vsub.f32 %v766, %v1276
    %v1278 = vand.u32 %v1277, 4294901760
    %1279 = vmatpush1.msra.mxu0 %v1278
    %1280 = vmatprep.subr.mxu0 0.0
    %v1281 = vand.u32 %v765, 4294901760
    %v1282 = vsub.f32 %v765, %v1281
    %v1283 = vand.u32 %v1282, 4294901760
    %1284 = vmatpush1.msra.mxu0 %v1283
    %1285 = vmatprep.subr.mxu0 0.0
    %v1286 = vand.u32 %v764, 4294901760
    %v1287 = vsub.f32 %v764, %v1286
    %v1288 = vand.u32 %v1287, 4294901760
    %1289 = vmatpush1.msra.mxu0 %v1288
    %1290 = vmatprep.subr.mxu0 0.0
    %v1291 = vand.u32 %v763, 4294901760
    %v1292 = vsub.f32 %v763, %v1291
    %v1293 = vand.u32 %v1292, 4294901760
    %1294 = vmatpush1.msra.mxu0 %v1293
    %1295 = vmatprep.subr.mxu0 0.0
    %v1296 = vand.u32 %v762, 4294901760
    %v1297 = vsub.f32 %v762, %v1296
    %v1298 = vand.u32 %v1297, 4294901760
    %1299 = vmatpush1.msra.mxu0 %v1298
    %1300 = vmatprep.subr.mxu0 0.0
    %v1301 = vand.u32 %v761, 4294901760
    %v1302 = vsub.f32 %v761, %v1301
    %v1303 = vand.u32 %v1302, 4294901760
    %1304 = vmatpush1.msra.mxu0 %v1303
    %1305 = vmatprep.subr.mxu0 0.0
    %v1306 = vand.u32 %v760, 4294901760
    %v1307 = vsub.f32 %v760, %v1306
    %v1308 = vand.u32 %v1307, 4294901760
    %1309 = vmatpush1.msra.mxu0 %v1308
    %1310 = vmatprep.subr.mxu0 0.0
    %v1311 = vand.u32 %v759, 4294901760
    %v1312 = vsub.f32 %v759, %v1311
    %v1313 = vand.u32 %v1312, 4294901760
    %1314 = vmatpush1.msra.mxu0 %v1313
    %1315 = vmatprep.subr.mxu0 0.0
    %v1316 = vand.u32 %v758, 4294901760
    %v1317 = vsub.f32 %v758, %v1316
    %v1318 = vand.u32 %v1317, 4294901760
    %1319 = vmatpush1.msra.mxu0 %v1318
    %1320 = vmatprep.subr.mxu0 0.0
    %1321 = vmatpush2.msra.mxu0 0.0
    %1322 = vmatprep.subr.mxu0 0.0
    %1323 = vmatpush2.msra.mxu0 0.0
    %1324 = vmatprep.subr.mxu0 0.0
    %1325 = vmatpush2.msra.mxu0 0.0
    %1326 = vmatprep.subr.mxu0 0.0
    %1327 = vmatpush2.msra.mxu0 0.0
    %1328 = vmatprep.subr.mxu0 0.0
    %1329 = vmatpush2.msra.mxu0 0.0
    %1330 = vmatprep.subr.mxu0 0.0
    %1331 = vmatpush2.msra.mxu0 0.0
    %1332 = vmatprep.subr.mxu0 0.0
    %1333 = vmatpush2.msra.mxu0 0.0
    %1334 = vmatprep.subr.mxu0 0.0
    %1335 = vmatpush2.msra.mxu0 0.0
    %1336 = vmatprep.subr.mxu0 0.0
    %1337 = vmatpush2.msra.mxu0 0.0
    %1338 = vmatprep.subr.mxu0 0.0
    %1339 = vmatpush2.msra.mxu0 0.0
    %1340 = vmatprep.subr.mxu0 0.0
    %1341 = vmatpush2.msra.mxu0 0.0
    %1342 = vmatprep.subr.mxu0 0.0
    %1343 = vmatpush2.msra.mxu0 0.0
    %1344 = vmatprep.subr.mxu0 0.0
    %1345 = vmatpush2.msra.mxu0 0.0
    %1346 = vmatprep.subr.mxu0 0.0
    %1347 = vmatpush2.msra.mxu0 0.0
    %1348 = vmatprep.subr.mxu0 0.0
    %1349 = vmatpush2.msra.mxu0 0.0
    %1350 = vmatprep.subr.mxu0 0.0
    %1351 = vmatpush2.msra.mxu0 0.0
    %1352 = vmatprep.mubr.f32.mxu0 0.0
    %v1353 = vand.u32 %v749, 4294901760
    %1354 = vmatmul.mubr.f32.gmra.mxu0 %v1353
    %v1355 = vpop.f32.mrf.mxu0
    %v1356 = vadd.f32 %v1229, %v1355
    %v1357 = vpop.f32.mrf.mxu0
    %1358 = vmatprep.mubr.f32.mxu0 0.0
    %v1359 = vand.u32 %v755, 4294901760
    %1360 = vmatmul.mubr.f32.gmra.mxu0 %v1359
    %v1361 = vpop.f32.mrf.mxu0
    %v1362 = vadd.f32 %v1237, %v1361
    %v1363 = vpop.f32.mrf.mxu0
    %1364 = vdwg.mxu0
    %1365 = vmatprep.subr.mxu0 0.0
    %v1366 = vand.u32 %v773, 4294901760
    %1367 = vmatpush1.msra.mxu0 %v1366
    %1368 = vmatprep.subr.mxu0 0.0
    %v1369 = vand.u32 %v772, 4294901760
    %1370 = vmatpush1.msra.mxu0 %v1369
    %1371 = vmatprep.subr.mxu0 0.0
    %v1372 = vand.u32 %v771, 4294901760
    %1373 = vmatpush1.msra.mxu0 %v1372
    %1374 = vmatprep.subr.mxu0 0.0
    %v1375 = vand.u32 %v770, 4294901760
    %1376 = vmatpush1.msra.mxu0 %v1375
    %1377 = vmatprep.subr.mxu0 0.0
    %v1378 = vand.u32 %v769, 4294901760
    %1379 = vmatpush1.msra.mxu0 %v1378
    %1380 = vmatprep.subr.mxu0 0.0
    %v1381 = vand.u32 %v768, 4294901760
    %1382 = vmatpush1.msra.mxu0 %v1381
    %1383 = vmatprep.subr.mxu0 0.0
    %v1384 = vand.u32 %v767, 4294901760
    %1385 = vmatpush1.msra.mxu0 %v1384
    %1386 = vmatprep.subr.mxu0 0.0
    %v1387 = vand.u32 %v766, 4294901760
    %1388 = vmatpush1.msra.mxu0 %v1387
    %1389 = vmatprep.subr.mxu0 0.0
    %v1390 = vand.u32 %v765, 4294901760
    %1391 = vmatpush1.msra.mxu0 %v1390
    %1392 = vmatprep.subr.mxu0 0.0
    %v1393 = vand.u32 %v764, 4294901760
    %1394 = vmatpush1.msra.mxu0 %v1393
    %1395 = vmatprep.subr.mxu0 0.0
    %v1396 = vand.u32 %v763, 4294901760
    %1397 = vmatpush1.msra.mxu0 %v1396
    %1398 = vmatprep.subr.mxu0 0.0
    %v1399 = vand.u32 %v762, 4294901760
    %1400 = vmatpush1.msra.mxu0 %v1399
    %1401 = vmatprep.subr.mxu0 0.0
    %v1402 = vand.u32 %v761, 4294901760
    %1403 = vmatpush1.msra.mxu0 %v1402
    %1404 = vmatprep.subr.mxu0 0.0
    %v1405 = vand.u32 %v760, 4294901760
    %1406 = vmatpush1.msra.mxu0 %v1405
    %1407 = vmatprep.subr.mxu0 0.0
    %v1408 = vand.u32 %v759, 4294901760
    %1409 = vmatpush1.msra.mxu0 %v1408
    %1410 = vmatprep.subr.mxu0 0.0
    %v1411 = vand.u32 %v758, 4294901760
    %1412 = vmatpush1.msra.mxu0 %v1411
    %1413 = vmatprep.subr.mxu0 0.0
    %1414 = vmatpush2.msra.mxu0 0.0
    %1415 = vmatprep.subr.mxu0 0.0
    %1416 = vmatpush2.msra.mxu0 0.0
    %1417 = vmatprep.subr.mxu0 0.0
    %1418 = vmatpush2.msra.mxu0 0.0
    %1419 = vmatprep.subr.mxu0 0.0
    %1420 = vmatpush2.msra.mxu0 0.0
    %1421 = vmatprep.subr.mxu0 0.0
    %1422 = vmatpush2.msra.mxu0 0.0
    %1423 = vmatprep.subr.mxu0 0.0
    %1424 = vmatpush2.msra.mxu0 0.0
    %1425 = vmatprep.subr.mxu0 0.0
    %1426 = vmatpush2.msra.mxu0 0.0
    %1427 = vmatprep.subr.mxu0 0.0
    %1428 = vmatpush2.msra.mxu0 0.0
    %1429 = vmatprep.subr.mxu0 0.0
    %1430 = vmatpush2.msra.mxu0 0.0
    %1431 = vmatprep.subr.mxu0 0.0
    %1432 = vmatpush2.msra.mxu0 0.0
    %1433 = vmatprep.subr.mxu0 0.0
    %1434 = vmatpush2.msra.mxu0 0.0
    %1435 = vmatprep.subr.mxu0 0.0
    %1436 = vmatpush2.msra.mxu0 0.0
    %1437 = vmatprep.subr.mxu0 0.0
    %1438 = vmatpush2.msra.mxu0 0.0
    %1439 = vmatprep.subr.mxu0 0.0
    %1440 = vmatpush2.msra.mxu0 0.0
    %1441 = vmatprep.subr.mxu0 0.0
    %1442 = vmatpush2.msra.mxu0 0.0
    %1443 = vmatprep.subr.mxu0 0.0
    %1444 = vmatpush2.msra.mxu0 0.0
    %1445 = vmatprep.mubr.f32.mxu0 0.0
    %v1446 = vand.u32 %v749, 4294901760
    %1447 = vmatmul.mubr.f32.gmra.mxu0 %v1446
    %v1448 = vpop.f32.mrf.mxu0
    %v1449 = vadd.f32 %v1356, %v1448
    %v1450 = vpop.f32.mrf.mxu0
    %1451 = vmatprep.mubr.f32.mxu0 0.0
    %v1452 = vand.u32 %v755, 4294901760
    %1453 = vmatmul.mubr.f32.gmra.mxu0 %v1452
    %v1454 = vpop.f32.mrf.mxu0
    %v1455 = vadd.f32 %v1362, %v1454
    %v1456 = vpop.f32.mrf.mxu0
    %1457 = vdwg.mxu0
    %1458 = vst [vmem:[#allocation8] sm:$0xff] %v1449
    %1459 = vst [vmem:[#allocation8 + $0x8] sm:$0xff] %v1455
    // Predicated region
    $region26: #{tpu_custom_call.1} parent=1 // pred_check
      _
    $region27: #{tpu_custom_call.1} parent=1 // pred_check_branch
      %1461 = sbr.rel (0) target = $region29
    $region28: #{tpu_custom_call.1} parent=1 // pred_region
      %s1463 = ssub.s32 256, 256
      %1464 = vsyncadd [#allocation4], %s1463
      %s1465 = sshll.u32 [#allocation8], 4
      %s1466 = int_to_ptr.vmem [resolvable:$true] %s1465
      %1471 = dma.vmem_to_hbm [thread:$0]  %s1466, 256, %s3, [#allocation4], 128, 128, 8
    $region29: #{tpu_custom_call.1} parent=1 // pred_fallthru
      _
    // Predicated region
    $region30: #{tpu_custom_call.1} parent=1 // pred_check
      _
    $region31: #{tpu_custom_call.1} parent=1 // pred_check_branch
      %1473 = sbr.rel (0) target = $region33
    $region32: #{tpu_custom_call.1} parent=1 // pred_region
      %1474 = dma.done [#allocation4], 256
    $region33: #{tpu_custom_call.1} parent=1 // pred_fallthru
      _
    %1475 = vsyncpa [#allocation3], 1
    %1476 = vsyncpa [#allocation6], 1
    %1477 = vsyncpa [#allocation4], 1

</llo_original>
